<compile_context>
chip_gen: v7x
topology: tpu7x:2x2x1
jax: 0.10.0
libtpu: 0.0.40
codegen_flags: <defaults>
</compile_context>

<pallas_src>
import math

import jax
import jax.numpy as jnp
from jax.experimental import pallas as pl
from jax.experimental.pallas import tpu as pltpu

EMBED_DIM = 32
HIDDEN_DIM = 128
FOLD = 4                      # tokens folded per 128-lane row (128 // EMBED_DIM)
TM_MAX_FOLD = 2048            # max folded rows per grid step (= 8192 tokens)
SPLIT_MIN_FOLD = 1024         # only split into >=2 tiles if each gets >=512 folded rows
APPROX_GELU = True            # tanh-approx GELU (EUP path); False = exact erf


def _cdiv(a, b):
    return (a + b - 1) // b


def _round_up(n, mult):
    return _cdiv(n, mult) * mult


def _ffn_kernel(x_ref, w1_ref, b1_ref, w2_ref, b2_ref, o_ref):
    # x: (tm, 128), w1: (128, 512), b1: (1, 512), w2: (512, 128), b2: (1, 128)
    x = x_ref[...]
    h = jnp.dot(x, w1_ref[...], preferred_element_type=jnp.float32) + b1_ref[...]
    if APPROX_GELU:
        # tanh-approximate GELU: tanh runs on the EUP (separate bundle slot).
        h = jax.nn.gelu(h, approximate=True)
    else:
        # exact erf GELU (torch.nn.GELU() default) - long VALU polynomial.
        h = 0.5 * h * (1.0 + jax.lax.erf(h * (1.0 / math.sqrt(2.0))))
    o = jnp.dot(h, w2_ref[...], preferred_element_type=jnp.float32) + b2_ref[...]
    o_ref[...] = o.astype(o_ref.dtype)


def feed_forward(x, w1, b1, w2, b2):
    """x: (..., EMBED_DIM) float32. Weights in (in, out) layout."""
    orig_shape = x.shape
    x2d = x.reshape(-1, EMBED_DIM)
    m = x2d.shape[0]

    # Lane-folded row count (FOLD tokens per 128-lane row).
    m_fold = _cdiv(m, FOLD)

    # Balanced tiles over the folded token axis (bounded padding waste).
    n_tiles = _cdiv(m_fold, TM_MAX_FOLD)
    if n_tiles < 2 and m_fold >= 2 * SPLIT_MIN_FOLD:
        n_tiles = 2  # keep both v7x TensorCores busy when there is enough work
    tm = _round_up(_cdiv(m_fold, n_tiles), 8)
    m_fold_pad = tm * n_tiles
    m_pad = m_fold_pad * FOLD

    if m_pad != m:
        x2d = jnp.pad(x2d, ((0, m_pad - m), (0, 0)))
    x_fold = x2d.reshape(m_fold_pad, FOLD * EMBED_DIM)  # (m/4, 128), lane-dense

    # Replicated block-diagonal weights; block-diagonality keeps the 4 folded
    # tokens independent.  VMEM-resident across all grid steps (~512 KiB).
    eye = jnp.eye(FOLD, dtype=w1.dtype)
    w1_bd = jnp.kron(eye, w1)                                   # (128, 512)
    w2_bd = jnp.kron(eye, w2)                                   # (512, 128)
    b1_bd = jnp.tile(b1, FOLD).reshape(1, FOLD * HIDDEN_DIM)    # (1, 512)
    b2_bd = jnp.tile(b2, FOLD).reshape(1, FOLD * EMBED_DIM)     # (1, 128)

    out_fold = pl.pallas_call(
        _ffn_kernel,
        out_shape=jax.ShapeDtypeStruct((m_fold_pad, FOLD * EMBED_DIM), x.dtype),
        grid=(n_tiles,),
        in_specs=[
            # x: tiled over the folded token axis, lane-dense
            pl.BlockSpec((tm, FOLD * EMBED_DIM), lambda i: (i, 0)),
            # weights / biases: full-shape, VMEM-resident across grid steps
            pl.BlockSpec((FOLD * EMBED_DIM, FOLD * HIDDEN_DIM), lambda i: (0, 0)),
            pl.BlockSpec((1, FOLD * HIDDEN_DIM), lambda i: (0, 0)),
            pl.BlockSpec((FOLD * HIDDEN_DIM, FOLD * EMBED_DIM), lambda i: (0, 0)),
            pl.BlockSpec((1, FOLD * EMBED_DIM), lambda i: (0, 0)),
        ],
        out_specs=pl.BlockSpec((tm, FOLD * EMBED_DIM), lambda i: (i, 0)),
        compiler_params=pltpu.CompilerParams(
            dimension_semantics=("parallel",),
            vmem_limit_bytes=32 * 1024 * 1024,
        ),
    )(x_fold, w1_bd, b1_bd, w2_bd, b2_bd)

    out = out_fold.reshape(m_pad, EMBED_DIM)
    if m_pad != m:
        out = out[:m]
    return out.reshape(orig_shape)


def init_params(key):
    """Deterministic init mimicking nn.Linear's uniform(-1/sqrt(fan_in), ...)."""
    k1, k2, k3, k4 = jax.random.split(key, 4)
    bound1 = 1.0 / math.sqrt(EMBED_DIM)
    bound2 = 1.0 / math.sqrt(HIDDEN_DIM)
    # Stored transposed relative to PyTorch (fc.weight is (out, in)); here (in, out)
    w1 = jax.random.uniform(k1, (EMBED_DIM, HIDDEN_DIM), jnp.float32, -bound1, bound1)
    b1 = jax.random.uniform(k2, (HIDDEN_DIM,), jnp.float32, -bound1, bound1)
    w2 = jax.random.uniform(k3, (HIDDEN_DIM, EMBED_DIM), jnp.float32, -bound2, bound2)
    b2 = jax.random.uniform(k4, (EMBED_DIM,), jnp.float32, -bound2, bound2)
    return w1, b1, w2, b2


if __name__ == "__main__":
    key = jax.random.PRNGKey(0)
    kx, kp = jax.random.split(key)
    w1, b1, w2, b2 = init_params(kp)

    def ref_ffn(x, exact):
        h = x @ w1 + b1
        if exact:
            h = 0.5 * h * (1.0 + jax.lax.erf(h / math.sqrt(2.0)))
        else:
            h = jax.nn.gelu(h, approximate=True)
        return h @ w2 + b2

    # Canonical small shape (batch=2, seq=8, embed=32) plus an odd size that
    # exercises the padding / balanced-tile path.
    for shape in [(2, 8, EMBED_DIM), (3, 37, EMBED_DIM)]:
        x = jax.random.normal(kx, shape, dtype=jnp.float32)
        out = jax.block_until_ready(feed_forward(x, w1, b1, w2, b2))
        assert out.shape == shape
        # Tight match against the tanh-approx (jax.nn.gelu) reference.
        assert jnp.allclose(out, ref_ffn(x, exact=False), atol=1e-5, rtol=1e-5)
        # Documented small delta vs. the exact-erf torch.nn.GELU() reference.
        assert jnp.allclose(out, ref_ffn(x, exact=True), atol=1e-2, rtol=0.0)

    print("KERNEL_OK")
</pallas_src>

<mosaic_0001>
module attributes {stable_mosaic.version = 11 : i64} {
  func.func @_ffn_kernel(%arg0: i32, %arg1: memref<8x128xf32, #tpu.memory_space<vmem>>, %arg2: memref<128x512xf32, #tpu.memory_space<vmem>>, %arg3: memref<1x512xf32, #tpu.memory_space<vmem>>, %arg4: memref<512x128xf32, #tpu.memory_space<vmem>>, %arg5: memref<1x128xf32, #tpu.memory_space<vmem>>, %arg6: memref<8x128xf32, #tpu.memory_space<vmem>>) attributes {dimension_semantics = [#tpu.dimension_semantics<parallel>], iteration_bounds = array<i64: 1>, scalar_prefetch = 0 : i64, scratch_operands = 0 : i64, tpu.core_type = #tpu.core_type<tc>, window_params = [{transform_indices = @transform_0, window_bounds = array<i64: 8, 128>}, {pipeline_mode = #tpu.pipeline_mode<synchronous>, transform_indices = @transform_1, window_bounds = array<i64: 128, 512>}, {pipeline_mode = #tpu.pipeline_mode<synchronous>, transform_indices = @transform_2, window_bounds = array<i64: 1, 512>}, {pipeline_mode = #tpu.pipeline_mode<synchronous>, transform_indices = @transform_3, window_bounds = array<i64: 512, 128>}, {pipeline_mode = #tpu.pipeline_mode<synchronous>, transform_indices = @transform_4, window_bounds = array<i64: 1, 128>}, {transform_indices = @transform_5, window_bounds = array<i64: 8, 128>}]} {
    %c0 = arith.constant 0 : index
    %c0_0 = arith.constant 0 : index
    %0 = vector.load %arg1[%c0, %c0_0] : memref<8x128xf32, #tpu.memory_space<vmem>>, vector<8x128xf32>
    %c0_1 = arith.constant 0 : index
    %c0_2 = arith.constant 0 : index
    %1 = vector.load %arg2[%c0_1, %c0_2] : memref<128x512xf32, #tpu.memory_space<vmem>>, vector<128x512xf32>
    %cst = arith.constant dense<0.000000e+00> : vector<8x512xf32>
    %2 = tpu.matmul %0, %1, %cst {dimension_numbers = #tpu.dot_dimension_numbers<[1], [0], [0], [1], [0, 0, 1, 1], [], []>} : vector<8x128xf32>, vector<128x512xf32>, vector<8x512xf32> -> vector<8x512xf32>
    %c0_3 = arith.constant 0 : index
    %c0_4 = arith.constant 0 : index
    %3 = vector.load %arg3[%c0_3, %c0_4] : memref<1x512xf32, #tpu.memory_space<vmem>>, vector<1x512xf32>
    %4 = vector.broadcast %3 : vector<1x512xf32> to vector<8x512xf32>
    %5 = arith.addf %2, %4 : vector<8x512xf32>
    %6 = arith.mulf %5, %5 : vector<8x512xf32>
    %7 = arith.mulf %5, %6 : vector<8x512xf32>
    %cst_5 = arith.constant 4.471500e-02 : f32
    %8 = vector.broadcast %cst_5 : f32 to vector<8x512xf32>
    %9 = arith.mulf %8, %7 : vector<8x512xf32>
    %10 = arith.addf %5, %9 : vector<8x512xf32>
    %cst_6 = arith.constant 0.797884583 : f32
    %11 = vector.broadcast %cst_6 : f32 to vector<8x512xf32>
    %12 = arith.mulf %11, %10 : vector<8x512xf32>
    %13 = math.tanh %12 : vector<8x512xf32>
    %cst_7 = arith.constant 1.000000e+00 : f32
    %14 = vector.broadcast %cst_7 : f32 to vector<8x512xf32>
    %15 = arith.addf %14, %13 : vector<8x512xf32>
    %cst_8 = arith.constant 5.000000e-01 : f32
    %16 = vector.broadcast %cst_8 : f32 to vector<8x512xf32>
    %17 = arith.mulf %16, %15 : vector<8x512xf32>
    %18 = arith.mulf %5, %17 : vector<8x512xf32>
    %c0_9 = arith.constant 0 : index
    %c0_10 = arith.constant 0 : index
    %19 = vector.load %arg4[%c0_9, %c0_10] : memref<512x128xf32, #tpu.memory_space<vmem>>, vector<512x128xf32>
    %cst_11 = arith.constant dense<0.000000e+00> : vector<8x128xf32>
    %20 = tpu.matmul %18, %19, %cst_11 {dimension_numbers = #tpu.dot_dimension_numbers<[1], [0], [0], [1], [0, 0, 1, 1], [], []>} : vector<8x512xf32>, vector<512x128xf32>, vector<8x128xf32> -> vector<8x128xf32>
    %c0_12 = arith.constant 0 : index
    %c0_13 = arith.constant 0 : index
    %21 = vector.load %arg5[%c0_12, %c0_13] : memref<1x128xf32, #tpu.memory_space<vmem>>, vector<1x128xf32>
    %22 = vector.broadcast %21 : vector<1x128xf32> to vector<8x128xf32>
    %23 = arith.addf %20, %22 : vector<8x128xf32>
    %c0_14 = arith.constant 0 : index
    %c0_15 = arith.constant 0 : index
    %24 = vector.load %arg6[%c0_14, %c0_15] : memref<8x128xf32, #tpu.memory_space<vmem>>, vector<8x128xf32>
    tpu.vector_store %arg6[%c0_14, %c0_15], %23 {strides = array<i32>} : memref<8x128xf32, #tpu.memory_space<vmem>>, vector<8x128xf32>,
    return
  }
  func.func @transform_0(%arg0: i32) -> (i32, i32) {
    %c0_i32 = arith.constant 0 : i32
    %c0_i32_0 = arith.constant 0 : i32
    return %arg0, %c0_i32 : i32, i32
  }
  func.func @transform_1(%arg0: i32) -> (i32, i32) {
    %c0_i32 = arith.constant 0 : i32
    %c0_i32_0 = arith.constant 0 : i32
    %c0_i32_1 = arith.constant 0 : i32
    return %c0_i32, %c0_i32_0 : i32, i32
  }
  func.func @transform_2(%arg0: i32) -> (i32, i32) {
    %c0_i32 = arith.constant 0 : i32
    %c0_i32_0 = arith.constant 0 : i32
    %c0_i32_1 = arith.constant 0 : i32
    return %c0_i32, %c0_i32_0 : i32, i32
  }
  func.func @transform_3(%arg0: i32) -> (i32, i32) {
    %c0_i32 = arith.constant 0 : i32
    %c0_i32_0 = arith.constant 0 : i32
    %c0_i32_1 = arith.constant 0 : i32
    return %c0_i32, %c0_i32_0 : i32, i32
  }
  func.func @transform_4(%arg0: i32) -> (i32, i32) {
    %c0_i32 = arith.constant 0 : i32
    %c0_i32_0 = arith.constant 0 : i32
    %c0_i32_1 = arith.constant 0 : i32
    return %c0_i32, %c0_i32_0 : i32, i32
  }
  func.func @transform_5(%arg0: i32) -> (i32, i32) {
    %c0_i32 = arith.constant 0 : i32
    %c0_i32_0 = arith.constant 0 : i32
    return %arg0, %c0_i32 : i32, i32
  }
}

</mosaic_0001>

<llo_original>
// kernel: tpu_custom_call.1
$region0: #{tpu_custom_call.1}
  #allocation0 [shape = 'u32[]', space=smem, size = 0x4, offset = 0x4, fixed_abs, tag = 'smem constant byte address 0x4 - core index']
  #allocation1 [shape = 'u32[144,128]{1,0:T(1,128)}', space=vmem, size = 0x12000, scoped, tag = 'internal scratch']
  %s0 = inlined_call_operand.hbm [shape: f32[8,128], index: 0, kind: input, shape index: {}]
  %s1 = inlined_call_operand.hbm [shape: f32[128,512], index: 1, kind: input, shape index: {}]
  %s2 = inlined_call_operand.vmem [shape: f32[1,512], index: 2, kind: input, shape index: {}]
  %s3 = inlined_call_operand.hbm [shape: f32[512,128], index: 3, kind: input, shape index: {}]
  %s4 = inlined_call_operand.vmem [shape: f32[1,128], index: 4, kind: input, shape index: {}]
  %s5 = inlined_call_operand.hbm [shape: f32[8,128], index: 5, kind: output, shape index: {}]
  %s6 = sld [smem:[#allocation0]]
  $region42: #{tpu_custom_call.1} parent=0
    _
  %s8 = ssub.s32 1, %s6
  %s9 = scalar_select 0, %s8, %s6
  $region1: #{tpu_custom_call.1} parent=0
    #allocation2 [shape = 'u8[4096]{0}', space=vmem, size = 0x1000, scoped, tag = 'input window, operand 0, single buffered']
    #allocation3 [shape = 's32[1]{0}', space=sflag, size = 0x4, scoped, tag = 'scoped memory for tpu_custom_call.1']
    #allocation4 [shape = 's32[1]{0}', space=sflag, size = 0x4, scoped, tag = 'scoped memory for tpu_custom_call.1']
    #allocation5 [shape = 'u8[262144]{0}', space=vmem, size = 0x40000, scoped, tag = 'input window, operand 1, single buffered']
    #allocation6 [shape = 's32[1]{0}', space=sflag, size = 0x4, scoped, tag = 'scoped memory for tpu_custom_call.1']
    #allocation7 [shape = 'u8[262144]{0}', space=vmem, size = 0x40000, scoped, tag = 'input window, operand 3, single buffered']
    #allocation8 [shape = 'u8[4096]{0}', space=vmem, size = 0x1000, scoped, tag = 'output window, operand 0, single buffered']
    %10 = vsyncpa [#allocation3], 0
    %11 = vsyncpa [#allocation6], 0
    %12 = vsyncpa [#allocation4], 0
    // Predicated region
    $region2: #{tpu_custom_call.1} parent=1 // pred_check
      _
    $region3: #{tpu_custom_call.1} parent=1 // pred_check_branch
      %14 = sbr.rel (0) target = $region5
    $region4: #{tpu_custom_call.1} parent=1 // pred_region
      %s16 = ssub.s32 128, 128
      %17 = vsyncadd [#allocation3], %s16
      %s19 = sshll.u32 [#allocation2], 4
      %s20 = int_to_ptr.vmem [resolvable:$true] %s19
      %22 = dma.hbm_to_vmem [thread:$0]  %s0, 128, %s20, [#allocation3]
    $region5: #{tpu_custom_call.1} parent=1 // pred_fallthru
      _
    // Predicated region
    $region6: #{tpu_custom_call.1} parent=1 // pred_check
      _
    $region7: #{tpu_custom_call.1} parent=1 // pred_check_branch
      %24 = sbr.rel (0) target = $region9
    $region8: #{tpu_custom_call.1} parent=1 // pred_region
      %s26 = ssub.s32 8192, 8192
      %27 = vsyncadd [#allocation6], %s26
      %s28 = sshll.u32 [#allocation5], 4
      %s29 = int_to_ptr.vmem [resolvable:$true] %s28
      %34 = dma.hbm_to_vmem [thread:$0]  %s1, 8192, %s29, [#allocation6], 512, 512, 32
    $region9: #{tpu_custom_call.1} parent=1 // pred_fallthru
      _
    // Predicated region
    $region10: #{tpu_custom_call.1} parent=1 // pred_check
      _
    $region11: #{tpu_custom_call.1} parent=1 // pred_check_branch
      %36 = sbr.rel (0) target = $region13
    $region12: #{tpu_custom_call.1} parent=1 // pred_region
      _
    $region13: #{tpu_custom_call.1} parent=1 // pred_fallthru
      _
    // Predicated region
    $region14: #{tpu_custom_call.1} parent=1 // pred_check
      _
    $region15: #{tpu_custom_call.1} parent=1 // pred_check_branch
      %38 = sbr.rel (0) target = $region17
    $region16: #{tpu_custom_call.1} parent=1 // pred_region
      %s40 = ssub.s32 8192, 8192
      %41 = vsyncadd [#allocation6], %s40
      %s42 = sshll.u32 [#allocation7], 4
      %s43 = int_to_ptr.vmem [resolvable:$true] %s42
      %48 = dma.hbm_to_vmem [thread:$0]  %s3, 8192, %s43, [#allocation6], 128, 128, 8
    $region17: #{tpu_custom_call.1} parent=1 // pred_fallthru
      _
    // Predicated region
    $region18: #{tpu_custom_call.1} parent=1 // pred_check
      _
    $region19: #{tpu_custom_call.1} parent=1 // pred_check_branch
      %50 = sbr.rel (0) target = $region21
    $region20: #{tpu_custom_call.1} parent=1 // pred_region
      _
    $region21: #{tpu_custom_call.1} parent=1 // pred_fallthru
      _
    // Predicated region
    $region22: #{tpu_custom_call.1} parent=1 // pred_check
      _
    $region23: #{tpu_custom_call.1} parent=1 // pred_check_branch
      %52 = sbr.rel (0) target = $region25
    $region24: #{tpu_custom_call.1} parent=1 // pred_region
      %53 = dma.done [#allocation3], 128
    $region25: #{tpu_custom_call.1} parent=1 // pred_fallthru
      _
    // Predicated region
    $region26: #{tpu_custom_call.1} parent=1 // pred_check
      _
    $region27: #{tpu_custom_call.1} parent=1 // pred_check_branch
      %55 = sbr.rel (0) target = $region29
    $region28: #{tpu_custom_call.1} parent=1 // pred_region
      %56 = dma.done [#allocation6], 8192
    $region29: #{tpu_custom_call.1} parent=1 // pred_fallthru
      _
    // Predicated region
    $region30: #{tpu_custom_call.1} parent=1 // pred_check
      _
    $region31: #{tpu_custom_call.1} parent=1 // pred_check_branch
      %58 = sbr.rel (0) target = $region33
    $region32: #{tpu_custom_call.1} parent=1 // pred_region
      %59 = dma.done [#allocation6], 8192
    $region33: #{tpu_custom_call.1} parent=1 // pred_fallthru
      _
    %v60 = vld [vmem:[#allocation2] sm:$0xff]
    %v61 = vld [vmem:[#allocation5] sm:$0xff]
    %v62 = vld [vmem:[#allocation5 + $0x8] sm:$0xff]
    %v63 = vld [vmem:[#allocation5 + $0x10] sm:$0xff]
    %v64 = vld [vmem:[#allocation5 + $0x18] sm:$0xff]
    %v65 = vld [vmem:[#allocation5 + $0x20] sm:$0xff]
    %v66 = vld [vmem:[#allocation5 + $0x28] sm:$0xff]
    %v67 = vld [vmem:[#allocation5 + $0x30] sm:$0xff]
    %v68 = vld [vmem:[#allocation5 + $0x38] sm:$0xff]
    %v69 = vld [vmem:[#allocation5 + $0x40] sm:$0xff]
    %v70 = vld [vmem:[#allocation5 + $0x48] sm:$0xff]
    %v71 = vld [vmem:[#allocation5 + $0x50] sm:$0xff]
    %v72 = vld [vmem:[#allocation5 + $0x58] sm:$0xff]
    %v73 = vld [vmem:[#allocation5 + $0x60] sm:$0xff]
    %v74 = vld [vmem:[#allocation5 + $0x68] sm:$0xff]
    %v75 = vld [vmem:[#allocation5 + $0x70] sm:$0xff]
    %v76 = vld [vmem:[#allocation5 + $0x78] sm:$0xff]
    %v77 = vld [vmem:[#allocation5 + $0x80] sm:$0xff]
    %v78 = vld [vmem:[#allocation5 + $0x88] sm:$0xff]
    %v79 = vld [vmem:[#allocation5 + $0x90] sm:$0xff]
    %v80 = vld [vmem:[#allocation5 + $0x98] sm:$0xff]
    %v81 = vld [vmem:[#allocation5 + $0xa0] sm:$0xff]
    %v82 = vld [vmem:[#allocation5 + $0xa8] sm:$0xff]
    %v83 = vld [vmem:[#allocation5 + $0xb0] sm:$0xff]
    %v84 = vld [vmem:[#allocation5 + $0xb8] sm:$0xff]
    %v85 = vld [vmem:[#allocation5 + $0xc0] sm:$0xff]
    %v86 = vld [vmem:[#allocation5 + $0xc8] sm:$0xff]
    %v87 = vld [vmem:[#allocation5 + $0xd0] sm:$0xff]
    %v88 = vld [vmem:[#allocation5 + $0xd8] sm:$0xff]
    %v89 = vld [vmem:[#allocation5 + $0xe0] sm:$0xff]
    %v90 = vld [vmem:[#allocation5 + $0xe8] sm:$0xff]
    %v91 = vld [vmem:[#allocation5 + $0xf0] sm:$0xff]
    %v92 = vld [vmem:[#allocation5 + $0xf8] sm:$0xff]
    %v93 = vld [vmem:[#allocation5 + $0x100] sm:$0xff]
    %v94 = vld [vmem:[#allocation5 + $0x108] sm:$0xff]
    %v95 = vld [vmem:[#allocation5 + $0x110] sm:$0xff]
    %v96 = vld [vmem:[#allocation5 + $0x118] sm:$0xff]
    %v97 = vld [vmem:[#allocation5 + $0x120] sm:$0xff]
    %v98 = vld [vmem:[#allocation5 + $0x128] sm:$0xff]
    %v99 = vld [vmem:[#allocation5 + $0x130] sm:$0xff]
    %v100 = vld [vmem:[#allocation5 + $0x138] sm:$0xff]
    %v101 = vld [vmem:[#allocation5 + $0x140] sm:$0xff]
    %v102 = vld [vmem:[#allocation5 + $0x148] sm:$0xff]
    %v103 = vld [vmem:[#allocation5 + $0x150] sm:$0xff]
    %v104 = vld [vmem:[#allocation5 + $0x158] sm:$0xff]
    %v105 = vld [vmem:[#allocation5 + $0x160] sm:$0xff]
    %v106 = vld [vmem:[#allocation5 + $0x168] sm:$0xff]
    %v107 = vld [vmem:[#allocation5 + $0x170] sm:$0xff]
    %v108 = vld [vmem:[#allocation5 + $0x178] sm:$0xff]
    %v109 = vld [vmem:[#allocation5 + $0x180] sm:$0xff]
    %v110 = vld [vmem:[#allocation5 + $0x188] sm:$0xff]
    %v111 = vld [vmem:[#allocation5 + $0x190] sm:$0xff]
    %v112 = vld [vmem:[#allocation5 + $0x198] sm:$0xff]
    %v113 = vld [vmem:[#allocation5 + $0x1a0] sm:$0xff]
    %v114 = vld [vmem:[#allocation5 + $0x1a8] sm:$0xff]
    %v115 = vld [vmem:[#allocation5 + $0x1b0] sm:$0xff]
    %v116 = vld [vmem:[#allocation5 + $0x1b8] sm:$0xff]
    %v117 = vld [vmem:[#allocation5 + $0x1c0] sm:$0xff]
    %v118 = vld [vmem:[#allocation5 + $0x1c8] sm:$0xff]
    %v119 = vld [vmem:[#allocation5 + $0x1d0] sm:$0xff]
    %v120 = vld [vmem:[#allocation5 + $0x1d8] sm:$0xff]
    %v121 = vld [vmem:[#allocation5 + $0x1e0] sm:$0xff]
    %v122 = vld [vmem:[#allocation5 + $0x1e8] sm:$0xff]
    %v123 = vld [vmem:[#allocation5 + $0x1f0] sm:$0xff]
    %v124 = vld [vmem:[#allocation5 + $0x1f8] sm:$0xff]
    %v125 = vld [vmem:[%s2] sm:$0xf]
    %v127 = vlaneseq
    %v128 = vshrl.u32 %v127, 7
    %v129 = vsub.s32 0, %v128
    %v130 = vrot.slane %v125, %v129
    %v131 = vlaneseq
    %v132 = vshrl.u32 %v131, 7
    %v133 = vsub.s32 1, %v132
    %v134 = vrot.slane %v125, %v133
    %v135 = vlaneseq
    %v136 = vshrl.u32 %v135, 7
    %v137 = vsub.s32 2, %v136
    %v138 = vrot.slane %v125, %v137
    %v139 = vlaneseq
    %v140 = vshrl.u32 %v139, 7
    %v141 = vsub.s32 3, %v140
    %v142 = vrot.slane %v125, %v141
    %147 = vmatprep.subr.mxu0 %v62
    %148 = vmatpush1.msra.mxu0 %v61
    %149 = vmatprep.subr.mxu0 %v66
    %150 = vmatpush1.msra.mxu0 %v65
    %151 = vmatprep.subr.mxu0 %v70
    %152 = vmatpush1.msra.mxu0 %v69
    %153 = vmatprep.subr.mxu0 %v74
    %154 = vmatpush1.msra.mxu0 %v73
    %155 = vmatprep.subr.mxu0 %v78
    %156 = vmatpush1.msra.mxu0 %v77
    %157 = vmatprep.subr.mxu0 %v82
    %158 = vmatpush1.msra.mxu0 %v81
    %159 = vmatprep.subr.mxu0 %v86
    %160 = vmatpush1.msra.mxu0 %v85
    %161 = vmatprep.subr.mxu0 %v90
    %162 = vmatpush1.msra.mxu0 %v89
    %163 = vmatprep.subr.mxu0 %v94
    %164 = vmatpush1.msra.mxu0 %v93
    %165 = vmatprep.subr.mxu0 %v98
    %166 = vmatpush1.msra.mxu0 %v97
    %167 = vmatprep.subr.mxu0 %v102
    %168 = vmatpush1.msra.mxu0 %v101
    %169 = vmatprep.subr.mxu0 %v106
    %170 = vmatpush1.msra.mxu0 %v105
    %171 = vmatprep.subr.mxu0 %v110
    %172 = vmatpush1.msra.mxu0 %v109
    %173 = vmatprep.subr.mxu0 %v114
    %174 = vmatpush1.msra.mxu0 %v113
    %175 = vmatprep.subr.mxu0 %v118
    %176 = vmatpush1.msra.mxu0 %v117
    %177 = vmatprep.subr.mxu0 %v122
    %178 = vmatpush1.msra.mxu0 %v121
    %179 = vmatprep.subr.mxu0 0.0
    %180 = vmatpush1.msra.mxu0 0.0
    %181 = vmatprep.subr.mxu0 0.0
    %182 = vmatpush1.msra.mxu0 0.0
    %183 = vmatprep.subr.mxu0 0.0
    %184 = vmatpush1.msra.mxu0 0.0
    %185 = vmatprep.subr.mxu0 0.0
    %186 = vmatpush1.msra.mxu0 0.0
    %187 = vmatprep.subr.mxu0 0.0
    %188 = vmatpush1.msra.mxu0 0.0
    %189 = vmatprep.subr.mxu0 0.0
    %190 = vmatpush1.msra.mxu0 0.0
    %191 = vmatprep.subr.mxu0 0.0
    %192 = vmatpush1.msra.mxu0 0.0
    %193 = vmatprep.subr.mxu0 0.0
    %194 = vmatpush1.msra.mxu0 0.0
    %195 = vmatprep.subr.mxu0 0.0
    %196 = vmatpush1.msra.mxu0 0.0
    %197 = vmatprep.subr.mxu0 0.0
    %198 = vmatpush1.msra.mxu0 0.0
    %199 = vmatprep.subr.mxu0 0.0
    %200 = vmatpush1.msra.mxu0 0.0
    %201 = vmatprep.subr.mxu0 0.0
    %202 = vmatpush1.msra.mxu0 0.0
    %203 = vmatprep.subr.mxu0 0.0
    %204 = vmatpush1.msra.mxu0 0.0
    %205 = vmatprep.subr.mxu0 0.0
    %206 = vmatpush1.msra.mxu0 0.0
    %207 = vmatprep.subr.mxu0 0.0
    %208 = vmatpush1.msra.mxu0 0.0
    %209 = vmatprep.subr.mxu0 0.0
    %210 = vmatpush1.msra.mxu0 0.0
    %211 = vmatprep.mubr.f32.mxu0 0.0
    %212 = vmatmul.mubr.f32.gmra.mrb[0].mxu0 %v60
    %v213 = vpop.f32.mrb[0].mxu0
    %v214 = vadd.f32 %v130, %v213
    %v215 = vpop.f32.mrb[0].mxu0
    %v216 = vadd.f32 %v134, %v215
    %217 = vdwg.mxu0
    %218 = vmatprep.subr.mxu0 %v64
    %219 = vmatpush1.msra.mxu0 %v63
    %220 = vmatprep.subr.mxu0 %v68
    %221 = vmatpush1.msra.mxu0 %v67
    %222 = vmatprep.subr.mxu0 %v72
    %223 = vmatpush1.msra.mxu0 %v71
    %224 = vmatprep.subr.mxu0 %v76
    %225 = vmatpush1.msra.mxu0 %v75
    %226 = vmatprep.subr.mxu0 %v80
    %227 = vmatpush1.msra.mxu0 %v79
    %228 = vmatprep.subr.mxu0 %v84
    %229 = vmatpush1.msra.mxu0 %v83
    %230 = vmatprep.subr.mxu0 %v88
    %231 = vmatpush1.msra.mxu0 %v87
    %232 = vmatprep.subr.mxu0 %v92
    %233 = vmatpush1.msra.mxu0 %v91
    %234 = vmatprep.subr.mxu0 %v96
    %235 = vmatpush1.msra.mxu0 %v95
    %236 = vmatprep.subr.mxu0 %v100
    %237 = vmatpush1.msra.mxu0 %v99
    %238 = vmatprep.subr.mxu0 %v104
    %239 = vmatpush1.msra.mxu0 %v103
    %240 = vmatprep.subr.mxu0 %v108
    %241 = vmatpush1.msra.mxu0 %v107
    %242 = vmatprep.subr.mxu0 %v112
    %243 = vmatpush1.msra.mxu0 %v111
    %244 = vmatprep.subr.mxu0 %v116
    %245 = vmatpush1.msra.mxu0 %v115
    %246 = vmatprep.subr.mxu0 %v120
    %247 = vmatpush1.msra.mxu0 %v119
    %248 = vmatprep.subr.mxu0 %v124
    %249 = vmatpush1.msra.mxu0 %v123
    %250 = vmatprep.subr.mxu0 0.0
    %251 = vmatpush1.msra.mxu0 0.0
    %252 = vmatprep.subr.mxu0 0.0
    %253 = vmatpush1.msra.mxu0 0.0
    %254 = vmatprep.subr.mxu0 0.0
    %255 = vmatpush1.msra.mxu0 0.0
    %256 = vmatprep.subr.mxu0 0.0
    %257 = vmatpush1.msra.mxu0 0.0
    %258 = vmatprep.subr.mxu0 0.0
    %259 = vmatpush1.msra.mxu0 0.0
    %260 = vmatprep.subr.mxu0 0.0
    %261 = vmatpush1.msra.mxu0 0.0
    %262 = vmatprep.subr.mxu0 0.0
    %263 = vmatpush1.msra.mxu0 0.0
    %264 = vmatprep.subr.mxu0 0.0
    %265 = vmatpush1.msra.mxu0 0.0
    %266 = vmatprep.subr.mxu0 0.0
    %267 = vmatpush1.msra.mxu0 0.0
    %268 = vmatprep.subr.mxu0 0.0
    %269 = vmatpush1.msra.mxu0 0.0
    %270 = vmatprep.subr.mxu0 0.0
    %271 = vmatpush1.msra.mxu0 0.0
    %272 = vmatprep.subr.mxu0 0.0
    %273 = vmatpush1.msra.mxu0 0.0
    %274 = vmatprep.subr.mxu0 0.0
    %275 = vmatpush1.msra.mxu0 0.0
    %276 = vmatprep.subr.mxu0 0.0
    %277 = vmatpush1.msra.mxu0 0.0
    %278 = vmatprep.subr.mxu0 0.0
    %279 = vmatpush1.msra.mxu0 0.0
    %280 = vmatprep.subr.mxu0 0.0
    %281 = vmatpush1.msra.mxu0 0.0
    %282 = vmatprep.mubr.f32.mxu0 0.0
    %283 = vmatmul.mubr.f32.gmra.mrb[0].mxu0 %v60
    %v284 = vpop.f32.mrb[0].mxu0
    %v285 = vadd.f32 %v138, %v284
    %v286 = vpop.f32.mrb[0].mxu0
    %v287 = vadd.f32 %v142, %v286
    %288 = vdwg.mxu0
    %v289 = vmul.f32 %v214, %v214
    %v290 = vmul.f32 %v216, %v216
    %v291 = vmul.f32 %v285, %v285
    %v292 = vmul.f32 %v287, %v287
    %v293 = vmul.f32 %v214, %v289
    %v294 = vmul.f32 %v216, %v290
    %v295 = vmul.f32 %v285, %v291
    %v296 = vmul.f32 %v287, %v292
    %v297 = vmul.f32 %v293, 0.044715
    %v298 = vmul.f32 %v294, 0.044715
    %v299 = vmul.f32 %v295, 0.044715
    %v300 = vmul.f32 %v296, 0.044715
    %v301 = vadd.f32 %v214, %v297
    %v302 = vadd.f32 %v216, %v298
    %v303 = vadd.f32 %v285, %v299
    %v304 = vadd.f32 %v287, %v300
    %v305 = vmul.f32 %v301, 0.7978846
    %v306 = vmul.f32 %v302, 0.7978846
    %v307 = vmul.f32 %v303, 0.7978846
    %v308 = vmul.f32 %v304, 0.7978846
    %v309 = vtanh.pop %v305
    %v310 = vtanh.pop %v306
    %v311 = vtanh.pop %v307
    %v312 = vtanh.pop %v308
    %v313 = vadd.f32 %v309, 1.0
    %v314 = vadd.f32 %v310, 1.0
    %v315 = vadd.f32 %v311, 1.0
    %v316 = vadd.f32 %v312, 1.0
    %v317 = vmul.f32 %v313, 0.5
    %v318 = vmul.f32 %v314, 0.5
    %v319 = vmul.f32 %v315, 0.5
    %v320 = vmul.f32 %v316, 0.5
    %v321 = vmul.f32 %v214, %v317
    %v322 = vmul.f32 %v216, %v318
    %v323 = vmul.f32 %v285, %v319
    %v324 = vmul.f32 %v287, %v320
    %v325 = vld [vmem:[#allocation7] sm:$0xff]
    %v326 = vld [vmem:[#allocation7 + $0x8] sm:$0xff]
    %v327 = vld [vmem:[#allocation7 + $0x10] sm:$0xff]
    %v328 = vld [vmem:[#allocation7 + $0x18] sm:$0xff]
    %v329 = vld [vmem:[#allocation7 + $0x20] sm:$0xff]
    %v330 = vld [vmem:[#allocation7 + $0x28] sm:$0xff]
    %v331 = vld [vmem:[#allocation7 + $0x30] sm:$0xff]
    %v332 = vld [vmem:[#allocation7 + $0x38] sm:$0xff]
    %v333 = vld [vmem:[#allocation7 + $0x40] sm:$0xff]
    %v334 = vld [vmem:[#allocation7 + $0x48] sm:$0xff]
    %v335 = vld [vmem:[#allocation7 + $0x50] sm:$0xff]
    %v336 = vld [vmem:[#allocation7 + $0x58] sm:$0xff]
    %v337 = vld [vmem:[#allocation7 + $0x60] sm:$0xff]
    %v338 = vld [vmem:[#allocation7 + $0x68] sm:$0xff]
    %v339 = vld [vmem:[#allocation7 + $0x70] sm:$0xff]
    %v340 = vld [vmem:[#allocation7 + $0x78] sm:$0xff]
    %v341 = vld [vmem:[#allocation7 + $0x80] sm:$0xff]
    %v342 = vld [vmem:[#allocation7 + $0x88] sm:$0xff]
    %v343 = vld [vmem:[#allocation7 + $0x90] sm:$0xff]
    %v344 = vld [vmem:[#allocation7 + $0x98] sm:$0xff]
    %v345 = vld [vmem:[#allocation7 + $0xa0] sm:$0xff]
    %v346 = vld [vmem:[#allocation7 + $0xa8] sm:$0xff]
    %v347 = vld [vmem:[#allocation7 + $0xb0] sm:$0xff]
    %v348 = vld [vmem:[#allocation7 + $0xb8] sm:$0xff]
    %v349 = vld [vmem:[#allocation7 + $0xc0] sm:$0xff]
    %v350 = vld [vmem:[#allocation7 + $0xc8] sm:$0xff]
    %v351 = vld [vmem:[#allocation7 + $0xd0] sm:$0xff]
    %v352 = vld [vmem:[#allocation7 + $0xd8] sm:$0xff]
    %v353 = vld [vmem:[#allocation7 + $0xe0] sm:$0xff]
    %v354 = vld [vmem:[#allocation7 + $0xe8] sm:$0xff]
    %v355 = vld [vmem:[#allocation7 + $0xf0] sm:$0xff]
    %v356 = vld [vmem:[#allocation7 + $0xf8] sm:$0xff]
    %v357 = vld [vmem:[#allocation7 + $0x100] sm:$0xff]
    %v358 = vld [vmem:[#allocation7 + $0x108] sm:$0xff]
    %v359 = vld [vmem:[#allocation7 + $0x110] sm:$0xff]
    %v360 = vld [vmem:[#allocation7 + $0x118] sm:$0xff]
    %v361 = vld [vmem:[#allocation7 + $0x120] sm:$0xff]
    %v362 = vld [vmem:[#allocation7 + $0x128] sm:$0xff]
    %v363 = vld [vmem:[#allocation7 + $0x130] sm:$0xff]
    %v364 = vld [vmem:[#allocation7 + $0x138] sm:$0xff]
    %v365 = vld [vmem:[#allocation7 + $0x140] sm:$0xff]
    %v366 = vld [vmem:[#allocation7 + $0x148] sm:$0xff]
    %v367 = vld [vmem:[#allocation7 + $0x150] sm:$0xff]
    %v368 = vld [vmem:[#allocation7 + $0x158] sm:$0xff]
    %v369 = vld [vmem:[#allocation7 + $0x160] sm:$0xff]
    %v370 = vld [vmem:[#allocation7 + $0x168] sm:$0xff]
    %v371 = vld [vmem:[#allocation7 + $0x170] sm:$0xff]
    %v372 = vld [vmem:[#allocation7 + $0x178] sm:$0xff]
    %v373 = vld [vmem:[#allocation7 + $0x180] sm:$0xff]
    %v374 = vld [vmem:[#allocation7 + $0x188] sm:$0xff]
    %v375 = vld [vmem:[#allocation7 + $0x190] sm:$0xff]
    %v376 = vld [vmem:[#allocation7 + $0x198] sm:$0xff]
    %v377 = vld [vmem:[#allocation7 + $0x1a0] sm:$0xff]
    %v378 = vld [vmem:[#allocation7 + $0x1a8] sm:$0xff]
    %v379 = vld [vmem:[#allocation7 + $0x1b0] sm:$0xff]
    %v380 = vld [vmem:[#allocation7 + $0x1b8] sm:$0xff]
    %v381 = vld [vmem:[#allocation7 + $0x1c0] sm:$0xff]
    %v382 = vld [vmem:[#allocation7 + $0x1c8] sm:$0xff]
    %v383 = vld [vmem:[#allocation7 + $0x1d0] sm:$0xff]
    %v384 = vld [vmem:[#allocation7 + $0x1d8] sm:$0xff]
    %v385 = vld [vmem:[#allocation7 + $0x1e0] sm:$0xff]
    %v386 = vld [vmem:[#allocation7 + $0x1e8] sm:$0xff]
    %v387 = vld [vmem:[#allocation7 + $0x1f0] sm:$0xff]
    %v388 = vld [vmem:[#allocation7 + $0x1f8] sm:$0xff]
    %v389 = vld [vmem:[%s4] sm:$0x1]
    %v391 = vlaneseq
    %v392 = vshrl.u32 %v391, 7
    %v393 = vsub.s32 0, %v392
    %v394 = vrot.slane %v389, %v393
    %396 = vmatprep.subr.mxu0 0.0
    %397 = vmatpush1.msra.mxu0 %v325
    %398 = vmatprep.subr.mxu0 0.0
    %399 = vmatpush1.msra.mxu0 %v326
    %400 = vmatprep.subr.mxu0 0.0
    %401 = vmatpush1.msra.mxu0 %v327
    %402 = vmatprep.subr.mxu0 0.0
    %403 = vmatpush1.msra.mxu0 %v328
    %404 = vmatprep.subr.mxu0 0.0
    %405 = vmatpush1.msra.mxu0 %v329
    %406 = vmatprep.subr.mxu0 0.0
    %407 = vmatpush1.msra.mxu0 %v330
    %408 = vmatprep.subr.mxu0 0.0
    %409 = vmatpush1.msra.mxu0 %v331
    %410 = vmatprep.subr.mxu0 0.0
    %411 = vmatpush1.msra.mxu0 %v332
    %412 = vmatprep.subr.mxu0 0.0
    %413 = vmatpush1.msra.mxu0 %v333
    %414 = vmatprep.subr.mxu0 0.0
    %415 = vmatpush1.msra.mxu0 %v334
    %416 = vmatprep.subr.mxu0 0.0
    %417 = vmatpush1.msra.mxu0 %v335
    %418 = vmatprep.subr.mxu0 0.0
    %419 = vmatpush1.msra.mxu0 %v336
    %420 = vmatprep.subr.mxu0 0.0
    %421 = vmatpush1.msra.mxu0 %v337
    %422 = vmatprep.subr.mxu0 0.0
    %423 = vmatpush1.msra.mxu0 %v338
    %424 = vmatprep.subr.mxu0 0.0
    %425 = vmatpush1.msra.mxu0 %v339
    %426 = vmatprep.subr.mxu0 0.0
    %427 = vmatpush1.msra.mxu0 %v340
    %428 = vmatprep.subr.mxu0 0.0
    %429 = vmatpush1.msra.mxu0 %v341
    %430 = vmatprep.subr.mxu0 0.0
    %431 = vmatpush1.msra.mxu0 %v342
    %432 = vmatprep.subr.mxu0 0.0
    %433 = vmatpush1.msra.mxu0 %v343
    %434 = vmatprep.subr.mxu0 0.0
    %435 = vmatpush1.msra.mxu0 %v344
    %436 = vmatprep.subr.mxu0 0.0
    %437 = vmatpush1.msra.mxu0 %v345
    %438 = vmatprep.subr.mxu0 0.0
    %439 = vmatpush1.msra.mxu0 %v346
    %440 = vmatprep.subr.mxu0 0.0
    %441 = vmatpush1.msra.mxu0 %v347
    %442 = vmatprep.subr.mxu0 0.0
    %443 = vmatpush1.msra.mxu0 %v348
    %444 = vmatprep.subr.mxu0 0.0
    %445 = vmatpush1.msra.mxu0 %v349
    %446 = vmatprep.subr.mxu0 0.0
    %447 = vmatpush1.msra.mxu0 %v350
    %448 = vmatprep.subr.mxu0 0.0
    %449 = vmatpush1.msra.mxu0 %v351
    %450 = vmatprep.subr.mxu0 0.0
    %451 = vmatpush1.msra.mxu0 %v352
    %452 = vmatprep.subr.mxu0 0.0
    %453 = vmatpush1.msra.mxu0 %v353
    %454 = vmatprep.subr.mxu0 0.0
    %455 = vmatpush1.msra.mxu0 %v354
    %456 = vmatprep.subr.mxu0 0.0
    %457 = vmatpush1.msra.mxu0 %v355
    %458 = vmatprep.subr.mxu0 0.0
    %459 = vmatpush1.msra.mxu0 %v356
    %460 = vmatprep.mubr.f32.mxu0 %v322
    %461 = vmatmul.mubr.f32.gmra.mrb[0].mxu0 %v321
    %v462 = vpop.f32.mrb[0].mxu0
    %v463 = vadd.f32 %v394, %v462
    %v464 = vpop.f32.mrb[0].mxu0
    %465 = vdwg.mxu0
    %466 = vmatprep.subr.mxu0 0.0
    %467 = vmatpush1.msra.mxu0 %v357
    %468 = vmatprep.subr.mxu0 0.0
    %469 = vmatpush1.msra.mxu0 %v358
    %470 = vmatprep.subr.mxu0 0.0
    %471 = vmatpush1.msra.mxu0 %v359
    %472 = vmatprep.subr.mxu0 0.0
    %473 = vmatpush1.msra.mxu0 %v360
    %474 = vmatprep.subr.mxu0 0.0
    %475 = vmatpush1.msra.mxu0 %v361
    %476 = vmatprep.subr.mxu0 0.0
    %477 = vmatpush1.msra.mxu0 %v362
    %478 = vmatprep.subr.mxu0 0.0
    %479 = vmatpush1.msra.mxu0 %v363
    %480 = vmatprep.subr.mxu0 0.0
    %481 = vmatpush1.msra.mxu0 %v364
    %482 = vmatprep.subr.mxu0 0.0
    %483 = vmatpush1.msra.mxu0 %v365
    %484 = vmatprep.subr.mxu0 0.0
    %485 = vmatpush1.msra.mxu0 %v366
    %486 = vmatprep.subr.mxu0 0.0
    %487 = vmatpush1.msra.mxu0 %v367
    %488 = vmatprep.subr.mxu0 0.0
    %489 = vmatpush1.msra.mxu0 %v368
    %490 = vmatprep.subr.mxu0 0.0
    %491 = vmatpush1.msra.mxu0 %v369
    %492 = vmatprep.subr.mxu0 0.0
    %493 = vmatpush1.msra.mxu0 %v370
    %494 = vmatprep.subr.mxu0 0.0
    %495 = vmatpush1.msra.mxu0 %v371
    %496 = vmatprep.subr.mxu0 0.0
    %497 = vmatpush1.msra.mxu0 %v372
    %498 = vmatprep.subr.mxu0 0.0
    %499 = vmatpush1.msra.mxu0 %v373
    %500 = vmatprep.subr.mxu0 0.0
    %501 = vmatpush1.msra.mxu0 %v374
    %502 = vmatprep.subr.mxu0 0.0
    %503 = vmatpush1.msra.mxu0 %v375
    %504 = vmatprep.subr.mxu0 0.0
    %505 = vmatpush1.msra.mxu0 %v376
    %506 = vmatprep.subr.mxu0 0.0
    %507 = vmatpush1.msra.mxu0 %v377
    %508 = vmatprep.subr.mxu0 0.0
    %509 = vmatpush1.msra.mxu0 %v378
    %510 = vmatprep.subr.mxu0 0.0
    %511 = vmatpush1.msra.mxu0 %v379
    %512 = vmatprep.subr.mxu0 0.0
    %513 = vmatpush1.msra.mxu0 %v380
    %514 = vmatprep.subr.mxu0 0.0
    %515 = vmatpush1.msra.mxu0 %v381
    %516 = vmatprep.subr.mxu0 0.0
    %517 = vmatpush1.msra.mxu0 %v382
    %518 = vmatprep.subr.mxu0 0.0
    %519 = vmatpush1.msra.mxu0 %v383
    %520 = vmatprep.subr.mxu0 0.0
    %521 = vmatpush1.msra.mxu0 %v384
    %522 = vmatprep.subr.mxu0 0.0
    %523 = vmatpush1.msra.mxu0 %v385
    %524 = vmatprep.subr.mxu0 0.0
    %525 = vmatpush1.msra.mxu0 %v386
    %526 = vmatprep.subr.mxu0 0.0
    %527 = vmatpush1.msra.mxu0 %v387
    %528 = vmatprep.subr.mxu0 0.0
    %529 = vmatpush1.msra.mxu0 %v388
    %530 = vmatprep.mubr.f32.mxu0 %v324
    %531 = vmatmul.mubr.f32.gmra.mrb[0].mxu0 %v323
    %v532 = vpop.f32.mrb[0].mxu0
    %v533 = vadd.f32 %v463, %v532
    %v534 = vpop.f32.mrb[0].mxu0
    %535 = vdwg.mxu0
    %536 = vst [vmem:[#allocation8] sm:$0xff] %v533
    // Predicated region
    $region34: #{tpu_custom_call.1} parent=1 // pred_check
      _
    $region35: #{tpu_custom_call.1} parent=1 // pred_check_branch
      %538 = sbr.rel (0) target = $region37
    $region36: #{tpu_custom_call.1} parent=1 // pred_region
      %s540 = ssub.s32 128, 128
      %541 = vsyncadd [#allocation4], %s540
      %s543 = sshll.u32 [#allocation8], 4
      %s544 = int_to_ptr.vmem [resolvable:$true] %s543
      %546 = dma.vmem_to_hbm [thread:$0]  %s544, 128, %s5, [#allocation4]
    $region37: #{tpu_custom_call.1} parent=1 // pred_fallthru
      _
    // Predicated region
    $region38: #{tpu_custom_call.1} parent=1 // pred_check
      _
    $region39: #{tpu_custom_call.1} parent=1 // pred_check_branch
      %548 = sbr.rel (0) target = $region41
    $region40: #{tpu_custom_call.1} parent=1 // pred_region
      %549 = dma.done [#allocation4], 128
    $region41: #{tpu_custom_call.1} parent=1 // pred_fallthru
      _
    %550 = vsyncpa [#allocation3], 1
    %551 = vsyncpa [#allocation6], 1
    %552 = vsyncpa [#allocation4], 1

</llo_original>
